<compile_context>
chip_gen: v7x
topology: tpu7x:2x2x1
jax: 0.10.0
libtpu: 0.0.40
codegen_flags: <defaults>
</compile_context>

<pallas_src>
import jax
import jax.numpy as jnp
from jax import lax
from jax.experimental import pallas as pl
from jax.experimental.pallas import tpu as pltpu


def _round_up(x, m):
    return ((x + m - 1) // m) * m


def _logits_lse_kernel(x_ref, w_ref, b_ref, logits_ref, lse_ref, m_ref, l_ref):
    """Grid = (row tiles, vocab tiles); vocab axis innermost / 'arbitrary'."""
    j = pl.program_id(1)

    @pl.when(j == 0)
    def _():
        m_ref[...] = jnp.full_like(m_ref, -jnp.inf)
        l_ref[...] = jnp.zeros_like(l_ref)

    # (tm, tn) logits tile: contract over H against the PyTorch-layout [tn, H] weight
    # tile (no transpose anywhere).  bf16 operands, f32 accumulation on the MXU.
    logits = lax.dot_general(
        x_ref[...], w_ref[...],
        dimension_numbers=(((1,), (1,)), ((), ())),
        preferred_element_type=jnp.float32,
    ) + b_ref[...]

    # Online (flash-style) logsumexp across vocab tiles, all in f32.
    m_prev = m_ref[...]
    m_new = jnp.maximum(m_prev, jnp.max(logits, axis=-1, keepdims=True))
    l_ref[...] = l_ref[...] * jnp.exp(m_prev - m_new) + jnp.sum(
        jnp.exp(logits - m_new), axis=-1, keepdims=True)
    m_ref[...] = m_new

    # Raw logits out: lane-dense store (tn is a multiple of 128).
    logits_ref[...] = logits

    @pl.when(j == pl.num_programs(1) - 1)
    def _():
        lse_ref[...] = m_ref[...] + jnp.log(l_ref[...])


def _normalize_kernel(logits_ref, lse_ref, o_ref):
    # log_softmax = logits - logsumexp(logits); lane-dense elementwise write.
    o_ref[...] = (logits_ref[...] - lse_ref[...]).astype(o_ref.dtype)


def masked_language_model(x, weight, bias, *, tm=256, tn=512,
                          compute_dtype=jnp.bfloat16,
                          vmem_limit_bytes=48 * 1024 * 1024):
    """log_softmax(x @ weight.T + bias, axis=-1).

    x: [..., H] float; weight: [V, H] (PyTorch nn.Linear layout); bias: [V].
    """
    orig_shape = x.shape
    H = orig_shape[-1]
    V = weight.shape[0]
    x2 = x.reshape(-1, H)
    M = x2.shape[0]

    # Tile sizes: large & MXU-aligned for real shapes; shrink to the (padded) toy
    # problem so small cases run as a single grid step per axis.
    tm_eff = min(tm, _round_up(M, 16))
    tn_eff = min(tn, _round_up(V, 128))
    m_pad = _round_up(M, tm_eff)
    v_pad = _round_up(V, tn_eff)
    nm = m_pad // tm_eff
    nv = v_pad // tn_eff

    # bf16 operands halve HBM traffic on the vocab-sized weight and use the bf16 MXU
    # path; bias and all softmax math stay f32.
    x_p = jnp.pad(x2, ((0, m_pad - M), (0, 0))).astype(compute_dtype)
    w_p = jnp.pad(weight, ((0, v_pad - V), (0, 0))).astype(compute_dtype)
    # Padded vocab columns get a very negative bias -> contribute ~0 to the LSE.
    b_p = jnp.pad(bias.astype(jnp.float32), (0, v_pad - V),
                  constant_values=-1e30).reshape(1, v_pad)

    logits, lse = pl.pallas_call(
        _logits_lse_kernel,
        out_shape=(
            jax.ShapeDtypeStruct((m_pad, v_pad), jnp.float32),
            jax.ShapeDtypeStruct((m_pad, 1), jnp.float32),
        ),
        grid=(nm, nv),
        in_specs=[
            pl.BlockSpec((tm_eff, H), lambda i, j: (i, 0)),   # row tile (resident over vocab axis)
            pl.BlockSpec((tn_eff, H), lambda i, j: (j, 0)),   # weight tile, [V, H] layout
            pl.BlockSpec((1, tn_eff), lambda i, j: (0, j)),   # bias tile
        ],
        out_specs=(
            pl.BlockSpec((tm_eff, tn_eff), lambda i, j: (i, j)),  # raw logits (lane-dense)
            pl.BlockSpec((tm_eff, 1), lambda i, j: (i, 0)),       # per-row LSE (resident over vocab axis)
        ),
        scratch_shapes=[
            pltpu.VMEM((tm_eff, 1), jnp.float32),   # running max
            pltpu.VMEM((tm_eff, 1), jnp.float32),   # running sum(exp)
        ],
        compiler_params=pltpu.CompilerParams(
            dimension_semantics=("parallel", "arbitrary"),
            vmem_limit_bytes=vmem_limit_bytes,
        ),
    )(x_p, w_p, b_p)

    # TODO(synk): for very large vocabs the `logits - lse` pass can be fused into pass 1
    # by keeping the whole (tm, V) row block resident in the output buffer, trading VMEM
    # for one fewer HBM round trip of the logits.
    out = pl.pallas_call(
        _normalize_kernel,
        out_shape=jax.ShapeDtypeStruct((m_pad, v_pad), x.dtype),
        grid=(nm, nv),
        in_specs=[
            pl.BlockSpec((tm_eff, tn_eff), lambda i, j: (i, j)),
            pl.BlockSpec((tm_eff, 1), lambda i, j: (i, 0)),
        ],
        out_specs=pl.BlockSpec((tm_eff, tn_eff), lambda i, j: (i, j)),
        compiler_params=pltpu.CompilerParams(
            dimension_semantics=("parallel", "parallel"),
            vmem_limit_bytes=vmem_limit_bytes,
        ),
    )(logits, lse)

    out = out[:M, :V]
    return out.reshape(*orig_shape[:-1], V)


if __name__ == "__main__":
    # Small MLM shapes implied by the module: batch=2, seq=8, hidden=32, vocab_size=300.
    batch, seq, hidden, vocab_size = 2, 8, 32, 300

    key = jax.random.PRNGKey(0)
    kx, kw, kb = jax.random.split(key, 3)

    x = jax.random.normal(kx, (batch, seq, hidden), dtype=jnp.float32)
    bound = 1.0 / (hidden ** 0.5)    # nn.Linear default init range
    weight = jax.random.uniform(kw, (vocab_size, hidden), jnp.float32,
                                minval=-bound, maxval=bound)
    bias = jax.random.uniform(kb, (vocab_size,), jnp.float32,
                              minval=-bound, maxval=bound)

    # tn=128 so the small vocab still exercises the multi-tile online-LSE path
    # (V=300 -> padded to 384 -> 3 vocab tiles) and the padding logic.
    out = masked_language_model(x, weight, bias, tn=128)
    out = jax.block_until_ready(out)
    assert out.shape == (batch, seq, vocab_size)

    # Reference with matching bf16 matmul precision (f32 accumulation).
    x2 = x.reshape(-1, hidden)
    ref_logits = jnp.dot(x2.astype(jnp.bfloat16), weight.T.astype(jnp.bfloat16),
                         preferred_element_type=jnp.float32) + bias
    ref = jax.nn.log_softmax(ref_logits, axis=-1).reshape(batch, seq, vocab_size)
    assert jnp.allclose(out, ref, atol=2e-3, rtol=2e-3), \
        float(jnp.max(jnp.abs(out - ref)))

    # Loose sanity check against the pure-f32 reference (module semantics).
    ref32 = jax.nn.log_softmax(x @ weight.T + bias, axis=-1)
    assert jnp.allclose(out, ref32, atol=5e-2, rtol=5e-2)

    print("KERNEL_OK")
</pallas_src>

<mosaic_0001>
module attributes {stable_mosaic.version = 11 : i64} {
  func.func @_logits_lse_kernel(%arg0: i32, %arg1: i32, %arg2: memref<16x32xbf16, #tpu.memory_space<vmem>>, %arg3: memref<128x32xbf16, #tpu.memory_space<vmem>>, %arg4: memref<1x128xf32, #tpu.memory_space<vmem>>, %arg5: memref<16x128xf32, #tpu.memory_space<vmem>>, %arg6: memref<16x1xf32, #tpu.memory_space<vmem>>, %arg7: memref<16x1xf32, #tpu.memory_space<vmem>>, %arg8: memref<16x1xf32, #tpu.memory_space<vmem>>) attributes {dimension_semantics = [#tpu.dimension_semantics<parallel>, #tpu.dimension_semantics<arbitrary>], iteration_bounds = array<i64: 1, 3>, scalar_prefetch = 0 : i64, scratch_operands = 2 : i64, tpu.core_type = #tpu.core_type<tc>, window_params = [{transform_indices = @transform_0, window_bounds = array<i64: 16, 32>}, {transform_indices = @transform_1, window_bounds = array<i64: 128, 32>}, {transform_indices = @transform_2, window_bounds = array<i64: 1, 128>}, {transform_indices = @transform_3, window_bounds = array<i64: 16, 128>}, {transform_indices = @transform_4, window_bounds = array<i64: 16, 1>}]} {
    %c0_i32 = arith.constant 0 : i32
    %0 = arith.cmpi eq, %arg1, %c0_i32 : i32
    %1 = arith.extui %0 : i1 to i32
    %c0_i32_0 = arith.constant 0 : i32
    %2 = arith.cmpi ne, %1, %c0_i32_0 : i32
    scf.if %2 {
      %cst_19 = arith.constant 0xFF800000 : f32
      %29 = vector.broadcast %cst_19 : f32 to vector<16x1xf32>
      %c0_20 = arith.constant 0 : index
      %c0_21 = arith.constant 0 : index
      %30 = vector.load %arg7[%c0_20, %c0_21] : memref<16x1xf32, #tpu.memory_space<vmem>>, vector<16x1xf32>
      tpu.vector_store %arg7[%c0_20, %c0_21], %29 {strides = array<i32>} : memref<16x1xf32, #tpu.memory_space<vmem>>, vector<16x1xf32>,
      %cst_22 = arith.constant 0.000000e+00 : f32
      %31 = vector.broadcast %cst_22 : f32 to vector<16x1xf32>
      %c0_23 = arith.constant 0 : index
      %c0_24 = arith.constant 0 : index
      %32 = vector.load %arg8[%c0_23, %c0_24] : memref<16x1xf32, #tpu.memory_space<vmem>>, vector<16x1xf32>
      tpu.vector_store %arg8[%c0_23, %c0_24], %31 {strides = array<i32>} : memref<16x1xf32, #tpu.memory_space<vmem>>, vector<16x1xf32>,
    } else {
    }
    %c0 = arith.constant 0 : index
    %c0_1 = arith.constant 0 : index
    %3 = vector.load %arg2[%c0, %c0_1] : memref<16x32xbf16, #tpu.memory_space<vmem>>, vector<16x32xbf16>
    %c0_2 = arith.constant 0 : index
    %c0_3 = arith.constant 0 : index
    %4 = vector.load %arg3[%c0_2, %c0_3] : memref<128x32xbf16, #tpu.memory_space<vmem>>, vector<128x32xbf16>
    %cst = arith.constant dense<0.000000e+00> : vector<16x128xf32>
    %5 = tpu.matmul %3, %4, %cst {dimension_numbers = #tpu.dot_dimension_numbers<[1], [1], [0], [0], [0, 0, 1, 0], [], []>} : vector<16x32xbf16>, vector<128x32xbf16>, vector<16x128xf32> -> vector<16x128xf32>
    %c0_4 = arith.constant 0 : index
    %c0_5 = arith.constant 0 : index
    %6 = vector.load %arg4[%c0_4, %c0_5] : memref<1x128xf32, #tpu.memory_space<vmem>>, vector<1x128xf32>
    %7 = vector.broadcast %6 : vector<1x128xf32> to vector<16x128xf32>
    %8 = arith.addf %5, %7 : vector<16x128xf32>
    %c0_6 = arith.constant 0 : index
    %c0_7 = arith.constant 0 : index
    %9 = vector.load %arg7[%c0_6, %c0_7] : memref<16x1xf32, #tpu.memory_space<vmem>>, vector<16x1xf32>
    %cst_8 = arith.constant dense<0xFF800000> : vector<16xf32>
    %10 = vector.multi_reduction <maximumf>, %8, %cst_8 [1] : vector<16x128xf32> to vector<16xf32>
    %11 = vector.shape_cast %10 : vector<16xf32> to vector<16x1xf32>
    %12 = arith.maximumf %9, %11 : vector<16x1xf32>
    %c0_9 = arith.constant 0 : index
    %c0_10 = arith.constant 0 : index
    %13 = vector.load %arg8[%c0_9, %c0_10] : memref<16x1xf32, #tpu.memory_space<vmem>>, vector<16x1xf32>
    %14 = arith.subf %9, %12 : vector<16x1xf32>
    %15 = math.exp %14 : vector<16x1xf32>
    %16 = arith.mulf %13, %15 : vector<16x1xf32>
    %17 = vector.broadcast %12 : vector<16x1xf32> to vector<16x128xf32>
    %18 = arith.subf %8, %17 : vector<16x128xf32>
    %19 = math.exp %18 : vector<16x128xf32>
    %cst_11 = arith.constant dense<0.000000e+00> : vector<16xf32>
    %20 = vector.multi_reduction <add>, %19, %cst_11 [1] : vector<16x128xf32> to vector<16xf32>
    %21 = vector.shape_cast %20 : vector<16xf32> to vector<16x1xf32>
    %22 = arith.addf %16, %21 : vector<16x1xf32>
    %c0_12 = arith.constant 0 : index
    %c0_13 = arith.constant 0 : index
    %23 = vector.load %arg8[%c0_12, %c0_13] : memref<16x1xf32, #tpu.memory_space<vmem>>, vector<16x1xf32>
    tpu.vector_store %arg8[%c0_12, %c0_13], %22 {strides = array<i32>} : memref<16x1xf32, #tpu.memory_space<vmem>>, vector<16x1xf32>,
    %c0_14 = arith.constant 0 : index
    %c0_15 = arith.constant 0 : index
    %24 = vector.load %arg7[%c0_14, %c0_15] : memref<16x1xf32, #tpu.memory_space<vmem>>, vector<16x1xf32>
    tpu.vector_store %arg7[%c0_14, %c0_15], %12 {strides = array<i32>} : memref<16x1xf32, #tpu.memory_space<vmem>>, vector<16x1xf32>,
    %c0_16 = arith.constant 0 : index
    %c0_17 = arith.constant 0 : index
    %25 = vector.load %arg5[%c0_16, %c0_17] : memref<16x128xf32, #tpu.memory_space<vmem>>, vector<16x128xf32>
    tpu.vector_store %arg5[%c0_16, %c0_17], %8 {strides = array<i32>} : memref<16x128xf32, #tpu.memory_space<vmem>>, vector<16x128xf32>,
    %c2_i32 = arith.constant 2 : i32
    %26 = arith.cmpi eq, %arg1, %c2_i32 : i32
    %27 = arith.extui %26 : i1 to i32
    %c0_i32_18 = arith.constant 0 : i32
    %28 = arith.cmpi ne, %27, %c0_i32_18 : i32
    scf.if %28 {
      %c0_19 = arith.constant 0 : index
      %c0_20 = arith.constant 0 : index
      %29 = vector.load %arg7[%c0_19, %c0_20] : memref<16x1xf32, #tpu.memory_space<vmem>>, vector<16x1xf32>
      %c0_21 = arith.constant 0 : index
      %c0_22 = arith.constant 0 : index
      %30 = vector.load %arg8[%c0_21, %c0_22] : memref<16x1xf32, #tpu.memory_space<vmem>>, vector<16x1xf32>
      %31 = math.log %30 : vector<16x1xf32>
      %32 = arith.addf %29, %31 : vector<16x1xf32>
      %c0_23 = arith.constant 0 : index
      %c0_24 = arith.constant 0 : index
      %33 = vector.load %arg6[%c0_23, %c0_24] : memref<16x1xf32, #tpu.memory_space<vmem>>, vector<16x1xf32>
      tpu.vector_store %arg6[%c0_23, %c0_24], %32 {strides = array<i32>} : memref<16x1xf32, #tpu.memory_space<vmem>>, vector<16x1xf32>,
    } else {
    }
    return
  }
  func.func @transform_0(%arg0: i32, %arg1: i32) -> (i32, i32) {
    %c0_i32 = arith.constant 0 : i32
    %c0_i32_0 = arith.constant 0 : i32
    return %arg0, %c0_i32 : i32, i32
  }
  func.func @transform_1(%arg0: i32, %arg1: i32) -> (i32, i32) {
    %c0_i32 = arith.constant 0 : i32
    %c0_i32_0 = arith.constant 0 : i32
    return %arg1, %c0_i32 : i32, i32
  }
  func.func @transform_2(%arg0: i32, %arg1: i32) -> (i32, i32) {
    %c0_i32 = arith.constant 0 : i32
    %c0_i32_0 = arith.constant 0 : i32
    return %c0_i32, %arg1 : i32, i32
  }
  func.func @transform_3(%arg0: i32, %arg1: i32) -> (i32, i32) {
    %c0_i32 = arith.constant 0 : i32
    return %arg0, %arg1 : i32, i32
  }
  func.func @transform_4(%arg0: i32, %arg1: i32) -> (i32, i32) {
    %c0_i32 = arith.constant 0 : i32
    %c0_i32_0 = arith.constant 0 : i32
    return %arg0, %c0_i32 : i32, i32
  }
}

</mosaic_0001>

<llo_original>
// kernel: tpu_custom_call.1
$region0: #{tpu_custom_call.1}
  #allocation0 [shape = 'u32[]', space=smem, size = 0x4, offset = 0x4, fixed_abs, tag = 'smem constant byte address 0x4 - core index']
  #allocation1 [shape = 'u32[144,128]{1,0:T(1,128)}', space=vmem, size = 0x12000, scoped, tag = 'internal scratch']
  #allocation2 [shape = 'f32[16,1]{1,0:T(8,128)}', space=vmem, size = 0x2000, scoped, tag = 'scratch operand']
  #allocation3 [shape = 'f32[16,1]{1,0:T(8,128)}', space=vmem, size = 0x2000, scoped, tag = 'scratch operand']
  %s0 = inlined_call_operand.vmem [shape: bf16[16,32], index: 0, kind: input, shape index: {}]
  %s1 = inlined_call_operand.vmem [shape: bf16[384,32], index: 1, kind: input, shape index: {}]
  %s2 = inlined_call_operand.vmem [shape: f32[1,384], index: 2, kind: input, shape index: {}]
  %s3 = inlined_call_operand.hbm [shape: f32[16,384], index: 3, kind: output, shape index: {0}]
  %s4 = inlined_call_operand.vmem [shape: f32[16,1], index: 4, kind: output, shape index: {1}]
  %5 = xla_tuple %s3, %s4
  %s6 = sld [smem:[#allocation0]]
  $region61: #{tpu_custom_call.1} parent=0
    _
  %s8 = ssub.s32 1, %s6
  %s9 = scalar_select 0, %s8, %s6
  $region1: #{tpu_custom_call.1} parent=0
    #allocation4 [shape = 'u8[16384]{0}', space=vmem, size = 0x4000, scoped, tag = 'output window, operand 0']
    #allocation5 [shape = 's32[2]{0}', space=sflag, size = 0x8, scoped, tag = 'scoped memory for tpu_custom_call.1']
    %10 = vsyncpa [#allocation5], 0
    %s11 = scalar_lea.sflag [#allocation5], 1
    %12 = vsyncpa %s11, 0
    loop: start=0, step=1, limit=5
    $region2: #{tpu_custom_call.1} parent=1 // loop_pre_header
      _
    $region3: #{tpu_custom_call.1} parent=1 // loop_header
      %s14 = sphi 0, %s18
      %p15 = scmp.ge.s32.totalorder %s14, 5
      %s21 = sphi 0, %s33
      %s22 = sphi 0, %s29
      %s23 = sphi 0, %s21
      %s24 = sphi 0, %s22
      %s25 = sphi 0, %s23
      %s26 = sphi 0, %s24
      %s36 = sphi 0, %s38
      %s39 = sphi 0, %s36
      %s40 = sphi 0, %s39
      %s56 = sphi 0, %s40
      %s62 = sphi 0, %s64
      %s65 = sphi 0, %s62
      %s66 = sphi 0, %s65
      %s82 = sphi 0, %s66
      %s88 = sphi 0, %s90
      %s91 = sphi 0, %s88
      %s92 = sphi 0, %s91
      %s108 = sphi 0, %s92
      %s116 = sphi 0, %s118
      %s119 = sphi 0, %s116
      %s120 = sphi 0, %s119
      %s136 = sphi 0, %s120
      %s142 = sphi 0, %s144
      %s145 = sphi 0, %s142
      %s146 = sphi 0, %s145
      %s162 = sphi 0, %s146
    $region4: #{tpu_custom_call.1} parent=1 // loop_header_branch
      %17 = sbr.rel (%p15) target = $region8
    $region5: #{tpu_custom_call.1} parent=1 // loop_body
      %s19 = ssub.s32 %s14, 1
      %s20 = ssub.s32 %s14, 2
      %s27 = sadd.s32 1, %s22
      %p28 = scmp.ge.s32.totalorder %s27, 3
      %s29 = scalar_select %p28, 0, %s27
      %s30 = sadd.s32 1, %s21
      %s31 = scalar_select %p28, %s30, %s21
      %p32 = scmp.ge.s32.totalorder %s31, 1
      %s33 = scalar_select %p32, 0, %s31
      %s34 = ssub.s32 %s21, %s33
      %p35 = scmp.eq.s32.totalorder %s34, 0
      %s37 = sadd.s32 %s36, 1
      %s38 = scalar_select %p35, %s36, %s37
      %p41 = pneg %p35
      %p42 = scmp.eq.s32.totalorder %s14, 2
      %p43 = por %p41, %p42
      %p44 = scmp.ne.s32.totalorder %s36, %s39
      %p45 = scmp.eq.s32.totalorder %s14, 0
      %p46 = por %p44, %p45
      %p47 = scmp.ne.s32.totalorder %s36, %s39
      %p48 = scmp.eq.s32.totalorder %s19, 2
      %p49 = por %p47, %p48
      %p50 = scmp.ne.s32.totalorder %s39, %s40
      %p51 = scmp.eq.s32.totalorder %s19, 0
      %p52 = por %p50, %p51
      %p53 = scmp.ne.s32.totalorder %s39, %s40
      %p54 = scmp.eq.s32.totalorder %s20, 2
      %p55 = por %p53, %p54
      %p57 = scmp.ne.s32.totalorder %s40, %s56
      %p58 = scmp.eq.s32.totalorder %s20, 0
      %p59 = por %p57, %p58
      %s60 = ssub.s32 %s22, %s29
      %p61 = scmp.eq.s32.totalorder %s60, 0
      %s63 = sadd.s32 %s62, 1
      %s64 = scalar_select %p61, %s62, %s63
      %p67 = pneg %p61
      %p68 = scmp.eq.s32.totalorder %s14, 2
      %p69 = por %p67, %p68
      %p70 = scmp.ne.s32.totalorder %s62, %s65
      %p71 = scmp.eq.s32.totalorder %s14, 0
      %p72 = por %p70, %p71
      %p73 = scmp.ne.s32.totalorder %s62, %s65
      %p74 = scmp.eq.s32.totalorder %s19, 2
      %p75 = por %p73, %p74
      %p76 = scmp.ne.s32.totalorder %s65, %s66
      %p77 = scmp.eq.s32.totalorder %s19, 0
      %p78 = por %p76, %p77
      %p79 = scmp.ne.s32.totalorder %s65, %s66
      %p80 = scmp.eq.s32.totalorder %s20, 2
      %p81 = por %p79, %p80
      %p83 = scmp.ne.s32.totalorder %s66, %s82
      %p84 = scmp.eq.s32.totalorder %s20, 0
      %p85 = por %p83, %p84
      %s86 = ssub.s32 %s22, %s29
      %p87 = scmp.eq.s32.totalorder %s86, 0
      %s89 = sadd.s32 %s88, 1
      %s90 = scalar_select %p87, %s88, %s89
      %p93 = pneg %p87
      %p94 = scmp.eq.s32.totalorder %s14, 2
      %p95 = por %p93, %p94
      %p96 = scmp.ne.s32.totalorder %s88, %s91
      %p97 = scmp.eq.s32.totalorder %s14, 0
      %p98 = por %p96, %p97
      %p99 = scmp.ne.s32.totalorder %s88, %s91
      %p100 = scmp.eq.s32.totalorder %s19, 2
      %p101 = por %p99, %p100
      %p102 = scmp.ne.s32.totalorder %s91, %s92
      %p103 = scmp.eq.s32.totalorder %s19, 0
      %p104 = por %p102, %p103
      %p105 = scmp.ne.s32.totalorder %s91, %s92
      %p106 = scmp.eq.s32.totalorder %s20, 2
      %p107 = por %p105, %p106
      %p109 = scmp.ne.s32.totalorder %s92, %s108
      %p110 = scmp.eq.s32.totalorder %s20, 0
      %p111 = por %p109, %p110
      %s112 = ssub.s32 %s21, %s33
      %s113 = ssub.s32 %s22, %s29
      %s114 = sor.u32 %s112, %s113
      %p115 = scmp.eq.s32.totalorder %s114, 0
      %s117 = sadd.s32 %s116, 1
      %s118 = scalar_select %p115, %s116, %s117
      %p121 = pneg %p115
      %p122 = scmp.eq.s32.totalorder %s14, 2
      %p123 = por %p121, %p122
      %p124 = scmp.ne.s32.totalorder %s116, %s119
      %p125 = scmp.eq.s32.totalorder %s14, 0
      %p126 = por %p124, %p125
      %p127 = scmp.ne.s32.totalorder %s116, %s119
      %p128 = scmp.eq.s32.totalorder %s19, 2
      %p129 = por %p127, %p128
      %p130 = scmp.ne.s32.totalorder %s119, %s120
      %p131 = scmp.eq.s32.totalorder %s19, 0
      %p132 = por %p130, %p131
      %p133 = scmp.ne.s32.totalorder %s119, %s120
      %p134 = scmp.eq.s32.totalorder %s20, 2
      %p135 = por %p133, %p134
      %p137 = scmp.ne.s32.totalorder %s120, %s136
      %p138 = scmp.eq.s32.totalorder %s20, 0
      %p139 = por %p137, %p138
      %s140 = ssub.s32 %s21, %s33
      %p141 = scmp.eq.s32.totalorder %s140, 0
      %s143 = sadd.s32 %s142, 1
      %s144 = scalar_select %p141, %s142, %s143
      %p147 = pneg %p141
      %p148 = scmp.eq.s32.totalorder %s14, 2
      %p149 = por %p147, %p148
      %p150 = scmp.ne.s32.totalorder %s142, %s145
      %p151 = scmp.eq.s32.totalorder %s14, 0
      %p152 = por %p150, %p151
      %p153 = scmp.ne.s32.totalorder %s142, %s145
      %p154 = scmp.eq.s32.totalorder %s19, 2
      %p155 = por %p153, %p154
      %p156 = scmp.ne.s32.totalorder %s145, %s146
      %p157 = scmp.eq.s32.totalorder %s19, 0
      %p158 = por %p156, %p157
      %p159 = scmp.ne.s32.totalorder %s145, %s146
      %p160 = scmp.eq.s32.totalorder %s20, 2
      %p161 = por %p159, %p160
      %p163 = scmp.ne.s32.totalorder %s146, %s162
      %p164 = scmp.eq.s32.totalorder %s20, 0
      %p165 = por %p163, %p164
      %p166 = scmp.le.s32.totalorder 1, %s14
      %p167 = scmp.lt.s32.totalorder %s14, 4
      %p168 = pnand %p166, %p167
      %p169 = pneg %p168
      // Predicated region
      $region9: #{tpu_custom_call.1} parent=5 // pred_check
        _
      $region10: #{tpu_custom_call.1} parent=5 // pred_check_branch
        %171 = sbr.rel (%p168) target = $region12
      $region11: #{tpu_custom_call.1} parent=5 // pred_region
        %s172 = ssub.s32 %s14, 1
        // Predicated region
        $region13: #{tpu_custom_call.1} parent=11 // pred_check
          %p173 = pneg %p52
        $region14: #{tpu_custom_call.1} parent=11 // pred_check_branch
          %175 = sbr.rel (%p173) target = $region16
        $region15: #{tpu_custom_call.1} parent=11 // pred_region
          %s176 = smul.u32 2, %s23
          %p177 = scmp.lt.s32.totalorder %s176, 1
          %s178 = scalar_select %p177, %s176, 1
          %s179 = smul.addr %s178, 4
          %s180 = scalar_lea.vmem %s0, %s179
          %s181 = smul.u32 2, %s23
        $region16: #{tpu_custom_call.1} parent=11 // pred_fallthru
          _
      $region12: #{tpu_custom_call.1} parent=5 // pred_fallthru
        _
      %p182 = scmp.lt.s32.totalorder %s14, 3
      // Predicated region
      $region17: #{tpu_custom_call.1} parent=5 // pred_check
        %p183 = pneg %p182
      $region18: #{tpu_custom_call.1} parent=5 // pred_check_branch
        %185 = sbr.rel (%p183) target = $region20
      $region19: #{tpu_custom_call.1} parent=5 // pred_region
        // Predicated region
        $region21: #{tpu_custom_call.1} parent=19 // pred_check
          %p186 = pneg %p72
        $region22: #{tpu_custom_call.1} parent=19 // pred_check_branch
          %188 = sbr.rel (%p186) target = $region24
        $region23: #{tpu_custom_call.1} parent=19 // pred_region
          %s189 = smul.u32 16, %s22
          %p190 = scmp.lt.s32.totalorder %s189, 47
          %s191 = scalar_select %p190, %s189, 47
          %s192 = smul.addr %s191, 4
          %s193 = scalar_lea.vmem %s1, %s192
          %s194 = smul.u32 16, %s22
        $region24: #{tpu_custom_call.1} parent=19 // pred_fallthru
          _
        // Predicated region
        $region25: #{tpu_custom_call.1} parent=19 // pred_check
          %p195 = pneg %p98
        $region26: #{tpu_custom_call.1} parent=19 // pred_check_branch
          %197 = sbr.rel (%p195) target = $region28
        $region27: #{tpu_custom_call.1} parent=19 // pred_region
          %p198 = scmp.lt.s32.totalorder %s22, 2
          %s199 = scalar_select %p198, %s22, 2
          %s200 = scalar_lea.vmem %s2, %s199
        $region28: #{tpu_custom_call.1} parent=19 // pred_fallthru
          _
      $region20: #{tpu_custom_call.1} parent=5 // pred_fallthru
        _
      %p201 = scmp.le.s32.totalorder 1, %s14
      %p202 = scmp.lt.s32.totalorder %s14, 4
      %p203 = pnand %p201, %p202
      %p204 = pneg %p203
      // Predicated region
      $region29: #{tpu_custom_call.1} parent=5 // pred_check
        _
      $region30: #{tpu_custom_call.1} parent=5 // pred_check_branch
        %206 = sbr.rel (%p203) target = $region32
      $region31: #{tpu_custom_call.1} parent=5 // pred_region
        %s207 = ssub.s32 %s14, 1
        %s208 = smul.u32 2, %s23
        %p209 = scmp.lt.s32.totalorder %s208, 1
        %s210 = scalar_select %p209, %s208, 1
        %s211 = smul.addr %s210, 4
        %s212 = scalar_lea.vmem %s0, %s211
        %p213 = pneg %p52
        %p214 = pneg %p49
        %s215 = smul.u32 16, %s24
        %p216 = scmp.lt.s32.totalorder %s215, 47
        %s217 = scalar_select %p216, %s215, 47
        %s218 = smul.addr %s217, 4
        %s219 = scalar_lea.vmem %s1, %s218
        %p220 = pneg %p78
        %p221 = pneg %p75
        %p222 = scmp.lt.s32.totalorder %s24, 2
        %s223 = scalar_select %p222, %s24, 2
        %s224 = scalar_lea.vmem %s2, %s223
        %p225 = pneg %p104
        %p226 = pneg %p101
        %p227 = pneg %p132
        %p228 = pneg %p129
        %s229 = sand.u32 %s119, 1
        %s230 = scalar_lea.sflag [#allocation5], %s229
        %s231 = sand.u32 %s119, 1
        %s232 = smul.addr %s231, 16
        %s233 = scalar_lea.vmem [#allocation4], %s232
        %p234 = pneg %p158
        %p235 = pneg %p155
        %s236 = smul.u32 2, %s23
        %p237 = scmp.lt.s32.totalorder %s236, 1
        %s238 = scalar_select %p237, %s236, 1
        %s239 = smul.addr %s238, 8
        %s240 = scalar_lea.vmem %s4, %s239
        %s241 = smul.u32 2, %s23
        %p242 = scmp.lt.s32.totalorder %s241, 1
        %s243 = scalar_select %p242, %s241, 1
        %s244 = smul.addr %s243, 4
        %s245 = scalar_lea.vmem %s0, %s244
        %s246 = smul.u32 2, %s23
        %s247 = smul.u32 16, %s24
        %p248 = scmp.lt.s32.totalorder %s247, 47
        %s249 = scalar_select %p248, %s247, 47
        %s250 = smul.addr %s249, 4
        %s251 = scalar_lea.vmem %s1, %s250
        %s252 = smul.u32 16, %s24
        %p253 = scmp.lt.s32.totalorder %s24, 2
        %s254 = scalar_select %p253, %s24, 2
        %s255 = scalar_lea.vmem %s2, %s254
        %s256 = smul.u32 2, %s23
        %s257 = smul.u32 2, %s23
        %p258 = scmp.lt.s32.totalorder %s257, 1
        %s259 = scalar_select %p258, %s257, 1
        %s260 = smul.addr %s259, 8
        %s261 = scalar_lea.vmem %s4, %s260
        %s262 = smul.u32 2, %s23
        %p264 = scmp.eq.s32.totalorder %s24, 0
        // Predicated region
        $region33: #{tpu_custom_call.1} parent=31 // pred_check
          %p265 = pneg %p264
        $region34: #{tpu_custom_call.1} parent=31 // pred_check_branch
          %267 = sbr.rel (%p265) target = $region36
        $region35: #{tpu_custom_call.1} parent=31 // pred_region
          %vm268 = vcmask 7168
          %269 = vst.msk [vmem:[#allocation2] sm:$0xff] %vm268, -inf
          %270 = vst.msk [vmem:[#allocation2 + $0x8] sm:$0xff] %vm268, -inf
          %271 = vst.msk [vmem:[#allocation3] sm:$0xff] %vm268, 0.0
          %272 = vst.msk [vmem:[#allocation3 + $0x8] sm:$0xff] %vm268, 0.0
        $region36: #{tpu_custom_call.1} parent=31 // pred_fallthru
          _
        %v273 = vld [vmem:[%s245] sm:$0xf]
        %v274 = vld [vmem:[%s245 + $0x4] sm:$0xf]
        %v275 = vld [vmem:[%s251] sm:$0xf]
        %v276 = vld [vmem:[%s251 + $0x4] sm:$0xf]
        %v277 = vld [vmem:[%s251 + $0x8] sm:$0xf]
        %v278 = vld [vmem:[%s251 + $0xc] sm:$0xf]
        %v279 = vld [vmem:[%s251 + $0x10] sm:$0xf]
        %v280 = vld [vmem:[%s251 + $0x14] sm:$0xf]
        %v281 = vld [vmem:[%s251 + $0x18] sm:$0xf]
        %v282 = vld [vmem:[%s251 + $0x1c] sm:$0xf]
        %v283 = vld [vmem:[%s251 + $0x20] sm:$0xf]
        %v284 = vld [vmem:[%s251 + $0x24] sm:$0xf]
        %v285 = vld [vmem:[%s251 + $0x28] sm:$0xf]
        %v286 = vld [vmem:[%s251 + $0x2c] sm:$0xf]
        %v287 = vld [vmem:[%s251 + $0x30] sm:$0xf]
        %v288 = vld [vmem:[%s251 + $0x34] sm:$0xf]
        %v289 = vld [vmem:[%s251 + $0x38] sm:$0xf]
        %v290 = vld [vmem:[%s251 + $0x3c] sm:$0xf]
        %v291 = vld [vmem:[%s255] sm:$0x1]
        %v293 = vlaneseq
        %v294 = vshrl.u32 %v293, 7
        %v295 = vsub.s32 0, %v294
        %v296 = vrot.slane %v291, %v295
        %v300 = vunpack.c.l.b16 %v273
        %v301 = vunpack.c.l.b16 %v274
        %v302 = vpack.c.b16 %v301, %v300
        %v319 = vunpack.c.l.b16 %v275
        %v320 = vunpack.c.l.b16 %v276
        %v321 = vunpack.c.l.b16 %v277
        %v322 = vunpack.c.l.b16 %v278
        %v323 = vunpack.c.l.b16 %v279
        %v324 = vunpack.c.l.b16 %v280
        %v325 = vunpack.c.l.b16 %v281
        %v326 = vunpack.c.l.b16 %v282
        %v327 = vunpack.c.l.b16 %v283
        %v328 = vunpack.c.l.b16 %v284
        %v329 = vunpack.c.l.b16 %v285
        %v330 = vunpack.c.l.b16 %v286
        %v331 = vunpack.c.l.b16 %v287
        %v332 = vunpack.c.l.b16 %v288
        %v333 = vunpack.c.l.b16 %v289
        %v334 = vunpack.c.l.b16 %v290
        %v335 = vpack.c.b16 %v320, %v319
        %v336 = vpack.c.b16 %v322, %v321
        %v337 = vpack.c.b16 %v324, %v323
        %v338 = vpack.c.b16 %v326, %v325
        %v339 = vpack.c.b16 %v328, %v327
        %v340 = vpack.c.b16 %v330, %v329
        %v341 = vpack.c.b16 %v332, %v331
        %v342 = vpack.c.b16 %v334, %v333
        %vm343 = vcmask 261120
        %v345 = vsel %vm343, %v302, 0
        %v348 = vsel %vm343, %v335, 0
        %v351 = vsel %vm343, %v336, 0
        %v354 = vsel %vm343, %v337, 0
        %v357 = vsel %vm343, %v338, 0
        %v360 = vsel %vm343, %v339, 0
        %v363 = vsel %vm343, %v340, 0
        %v366 = vsel %vm343, %v341, 0
        %v369 = vsel %vm343, %v342, 0
        %371 = vmatprep.subr.bf16.mxu0 0
        %372 = vmatpush1.bf16.xpose.msra.mxu0 %v348
        %373 = vmatprep.subr.bf16.mxu0 0
        %374 = vmatpush1.bf16.xpose.msra.mxu0 %v351
        %375 = vmatprep.subr.bf16.mxu0 0
        %376 = vmatpush1.bf16.xpose.msra.mxu0 %v354
        %377 = vmatprep.subr.bf16.mxu0 0
        %378 = vmatpush1.bf16.xpose.msra.mxu0 %v357
        %379 = vmatprep.subr.bf16.mxu0 0
        %380 = vmatpush1.bf16.xpose.msra.mxu0 %v360
        %381 = vmatprep.subr.bf16.mxu0 0
        %382 = vmatpush1.bf16.xpose.msra.mxu0 %v363
        %383 = vmatprep.subr.bf16.mxu0 0
        %384 = vmatpush1.bf16.xpose.msra.mxu0 %v366
        %385 = vmatprep.subr.bf16.mxu0 0
        %386 = vmatpush1.bf16.xpose.msra.mxu0 %v369
        %387 = vmatprep.subr.bf16.mxu0 0
        %388 = vmatpush1.bf16.xpose.msra.mxu0 0
        %389 = vmatprep.subr.bf16.mxu0 0
        %390 = vmatpush1.bf16.xpose.msra.mxu0 0
        %391 = vmatprep.subr.bf16.mxu0 0
        %392 = vmatpush1.bf16.xpose.msra.mxu0 0
        %393 = vmatprep.subr.bf16.mxu0 0
        %394 = vmatpush1.bf16.xpose.msra.mxu0 0
        %395 = vmatprep.subr.bf16.mxu0 0
        %396 = vmatpush1.bf16.xpose.msra.mxu0 0
        %397 = vmatprep.subr.bf16.mxu0 0
        %398 = vmatpush1.bf16.xpose.msra.mxu0 0
        %399 = vmatprep.subr.bf16.mxu0 0
        %400 = vmatpush1.bf16.xpose.msra.mxu0 0
        %401 = vmatprep.subr.bf16.mxu0 0
        %402 = vmatpush1.bf16.xpose.msra.mxu0 0
        %403 = vmatprep.mubr.bf16.mxu0 0
        %404 = vmatmul.mubr.bf16.gmra.mrb[0].mxu0 %v345
        %v405 = vpop.f32.mrb[0].mxu0
        %v406 = vadd.f32 %v296, %v405
        %v407 = vpop.f32.mrb[0].mxu0
        %v408 = vpop.f32.mrb[0].mxu0
        %v409 = vadd.f32 %v296, %v408
        %v410 = vpop.f32.mrb[0].mxu0
        %411 = vdwg.mxu0
        %v412 = vld [vmem:[#allocation2] sm:$0xff]
        %v413 = vld [vmem:[#allocation2 + $0x8] sm:$0xff]
        %414 = vmax.xlane.f32.xlu0 %v406
        %v415 = vpop.xlane.xlu0 %414
        %416 = vmax.xlane.f32.xlu0 %v409
        %v417 = vpop.xlane.xlu0 %416
        %v418 = vmax.f32 %v412, %v415
        %v419 = vmax.f32 %v413, %v417
        %v420 = vld [vmem:[#allocation3] sm:$0xff]
        %v421 = vld [vmem:[#allocation3 + $0x8] sm:$0xff]
        %v422 = vsub.f32 %v412, %v418
        %v423 = vsub.f32 %v413, %v419
        %v424 = vmul.f32 %v422, 1.442695
        %v425 = vpow.pop %v424
        %v426 = vmul.f32 %v423, 1.442695
        %v427 = vpow.pop %v426
        %v428 = vmul.f32 %v420, %v425
        %v429 = vmul.f32 %v421, %v427
        %431 = vset.pattern.permute.xlu0 0
        %432 = vperm.xlu0 %431, %v418
        %v433 = vpop.permute.xlu0 %432
        %436 = vset.pattern.permute.xlu0 0
        %437 = vperm.xlu0 %436, %v419
        %v438 = vpop.permute.xlu0 %437
        %v440 = vsub.f32 %v406, %v433
        %v441 = vsub.f32 %v409, %v438
        %v442 = vmul.f32 %v440, 1.442695
        %v443 = vpow.pop %v442
        %v444 = vmul.f32 %v441, 1.442695
        %v445 = vpow.pop %v444
        %446 = vadd.xlane.f32.xlu0 %v443
        %v447 = vpop.xlane.xlu0 %446
        %448 = vadd.xlane.f32.xlu0 %v445
        %v449 = vpop.xlane.xlu0 %448
        %v450 = vadd.f32 %v428, %v447
        %v451 = vadd.f32 %v429, %v449
        %vm452 = vcmask 7168
        %453 = vst.msk [vmem:[#allocation3] sm:$0xff] %vm452, %v450
        %454 = vst.msk [vmem:[#allocation3 + $0x8] sm:$0xff] %vm452, %v451
        %455 = vst.msk [vmem:[#allocation2] sm:$0xff] %vm452, %v418
        %456 = vst.msk [vmem:[#allocation2 + $0x8] sm:$0xff] %vm452, %v419
        %457 = vst [vmem:[%s233] sm:$0xff] %v406
        %458 = vst [vmem:[%s233 + $0x8] sm:$0xff] %v409
        %p459 = scmp.eq.s32.totalorder %s24, 2
        // Predicated region
        $region37: #{tpu_custom_call.1} parent=31 // pred_check
          %p460 = pneg %p459
        $region38: #{tpu_custom_call.1} parent=31 // pred_check_branch
          %462 = sbr.rel (%p460) target = $region40
        $region39: #{tpu_custom_call.1} parent=31 // pred_region
          %v463 = vld [vmem:[#allocation2] sm:$0xff]
          %v464 = vld [vmem:[#allocation2 + $0x8] sm:$0xff]
          %v465 = vld [vmem:[#allocation3] sm:$0xff]
          %v466 = vld [vmem:[#allocation3 + $0x8] sm:$0xff]
          %v467 = vlog2.pop %v465
          %v468 = vmul.f32 %v467, 0.6931472
          %v469 = vlog2.pop %v466
          %v470 = vmul.f32 %v469, 0.6931472
          %v471 = vadd.f32 %v463, %v468
          %v472 = vadd.f32 %v464, %v470
          %473 = vst.msk [vmem:[%s261] sm:$0xff] %vm452, %v471
          %474 = vst.msk [vmem:[%s261 + $0x8] sm:$0xff] %vm452, %v472
        $region40: #{tpu_custom_call.1} parent=31 // pred_fallthru
          _
        %s475 = sand.u32 %s119, 1
        %s476 = scalar_lea.sflag [#allocation5], %s475
        %s477 = sand.u32 %s119, 1
        %s478 = smul.addr %s477, 16
        %s479 = scalar_lea.vmem [#allocation4], %s478
        %s480 = smul.u32 2, %s23
        %p481 = scmp.lt.s32.totalorder %s480, 1
        %s482 = scalar_select %p481, %s480, 1
        %s483 = smul.addr %s482, 8
        %s484 = scalar_lea.vmem %s4, %s483
        // Predicated region
        $region41: #{tpu_custom_call.1} parent=31 // pred_check
          %p485 = pneg %p129
        $region42: #{tpu_custom_call.1} parent=31 // pred_check_branch
          %487 = sbr.rel (%p485) target = $region44
        $region43: #{tpu_custom_call.1} parent=31 // pred_region
          %s488 = smul.u32 2, %s23
          %s490 = ssub.s32 256, 256
          %491 = vsyncadd %s476, %s490
          %s492 = smul.addr %s488, 3
          %s493 = sadd.s32 %s24, %s492
          %s494 = smul.addr %s493, 128
          %s495 = scalar_lea.hbm %s3, %s494
          %s496 = sshll.u32 %s479, 4
          %s497 = int_to_ptr.vmem [resolvable:$true] %s496
          %502 = dma.vmem_to_hbm [thread:$0]  %s497, 256, %s495, %s476, 128, 384, 8
        $region44: #{tpu_custom_call.1} parent=31 // pred_fallthru
          _
        // Predicated region
        $region45: #{tpu_custom_call.1} parent=31 // pred_check
          %p503 = pneg %p155
        $region46: #{tpu_custom_call.1} parent=31 // pred_check_branch
          %505 = sbr.rel (%p503) target = $region48
        $region47: #{tpu_custom_call.1} parent=31 // pred_region
          %s506 = smul.u32 2, %s23
        $region48: #{tpu_custom_call.1} parent=31 // pred_fallthru
          _
        // Predicated region
        $region49: #{tpu_custom_call.1} parent=31 // pred_check
          %p507 = pneg %p155
        $region50: #{tpu_custom_call.1} parent=31 // pred_check_branch
          %509 = sbr.rel (%p507) target = $region52
        $region51: #{tpu_custom_call.1} parent=31 // pred_region
          %s510 = smul.u32 2, %s23
          %p511 = scmp.lt.s32.totalorder %s510, 1
          %s512 = scalar_select %p511, %s510, 1
          %s513 = smul.addr %s512, 8
          %s514 = scalar_lea.vmem %s4, %s513
        $region52: #{tpu_custom_call.1} parent=31 // pred_fallthru
          _
      $region32: #{tpu_custom_call.1} parent=5 // pred_fallthru
        _
      %p515 = scmp.le.s32.totalorder 2, %s14
      // Predicated region
      $region53: #{tpu_custom_call.1} parent=5 // pred_check
        %p516 = pneg %p515
      $region54: #{tpu_custom_call.1} parent=5 // pred_check_branch
        %518 = sbr.rel (%p516) target = $region56
      $region55: #{tpu_custom_call.1} parent=5 // pred_region
        %s519 = ssub.s32 %s14, 2
        // Predicated region
        $region57: #{tpu_custom_call.1} parent=55 // pred_check
          %p520 = pneg %p135
        $region58: #{tpu_custom_call.1} parent=55 // pred_check_branch
          %522 = sbr.rel (%p520) target = $region60
        $region59: #{tpu_custom_call.1} parent=55 // pred_region
          %s523 = sand.u32 %s120, 1
          %s524 = scalar_lea.sflag [#allocation5], %s523
          %s525 = sand.u32 %s120, 1
          %s526 = smul.addr %s525, 16
          %s527 = scalar_lea.vmem [#allocation4], %s526
          %528 = dma.done %s524, 256
        $region60: #{tpu_custom_call.1} parent=55 // pred_fallthru
          _
      $region56: #{tpu_custom_call.1} parent=5 // pred_fallthru
        _
    $region6: #{tpu_custom_call.1} parent=1 // loop_footer
      %s18 = sadd.s32 1, %s14
    $region7: #{tpu_custom_call.1} parent=1 // loop_footer_branch
      %13 = sbr.rel target = $region3
    $region8: #{tpu_custom_call.1} parent=1 // loop_exit
      _
    %529 = vsyncpa [#allocation5], 1
    %s530 = scalar_lea.sflag [#allocation5], 1
    %531 = vsyncpa %s530, 1

</llo_original>
